<compile_context>
chip_gen: v5e
topology: v5e:2x2
jax: 0.10.0
libtpu: 0.0.40
codegen_flags: <defaults>
</compile_context>

<pallas_src>
import warnings

import jax
import jax.numpy as jnp
from jax.experimental import pallas as pl
from jax.experimental.pallas import tpu as pltpu


# ~2 MiB blocks: ~85% of HBM roofline for tiled elementwise work; the 4x
# double-buffered in+out footprint stays well under every generation's scoped
# VMEM default (16/32/32 MiB on v5e/v6e/v7x) and v7x's 64 MiB physical VMEM.
_BLOCK_BUDGET = 2 * 1024 * 1024
_BLOCK_FLOOR = 512 * 1024     # don't shrink blocks below this just to add steps
_MIN_STEPS = 4                # enough to pipeline and shard across v7x's 2 TCs
_LANE_CAP = 1024              # lane (last-dim) width cap; multiple of 128

_COMPILER_PARAMS = pltpu.CompilerParams(
    dimension_semantics=("parallel", "parallel"),   # both grid axes independent
    vmem_limit_bytes=32 * 1024 * 1024,              # explicit, safe on v5e..v7x
)


def _silu_kernel(x_ref, o_ref):
    # TODO(synk): the module's generic `op` is specialized to SiLU; another
    # elementwise op would only change this body.
    x = x_ref[...]
    # sigmoid(x) = 0.5*tanh(x/2) + 0.5: single EUP transcendental, no exp
    # overflow, no Newton-refined divide on the VALU (v7x slot headroom).
    o_ref[...] = x * (0.5 * jnp.tanh(0.5 * x) + 0.5)


def _divisors(n):
    ds, i = [], 1
    while i * i <= n:
        if n % i == 0:
            ds.append(i)
            if i != n // i:
                ds.append(n // i)
        i += 1
    return sorted(ds)


def _pick_lane_width(n, cap=_LANE_CAP):
    """Largest multiple of 128 that divides n and is <= cap (0 if none)."""
    best, l = 0, 128
    while l <= min(cap, n):
        if n % l == 0:
            best = l
        l += 128
    return best


def _choose_tiles(batch, rows, row_bytes, *, rows_full,
                  budget=_BLOCK_BUDGET, floor=_BLOCK_FLOOR, min_steps=_MIN_STEPS):
    """Pick (batch_block, row_block) for a (batch//bb, rows//rb) grid.

    Row blocks obey the sublane rule: multiples of 8, or the full `rows`
    extent when it spans the view's whole second-to-last dim (`rows_full`).
    Preference: fit the ~2 MiB budget; reach >=4 grid steps (>=2 as fallback)
    without dropping blocks below ~512 KiB; then the largest block.
    Returns None if no legal row block exists.
    """
    r_opts = [d for d in _divisors(rows) if d % 8 == 0]
    if rows_full and rows not in r_opts:
        r_opts.append(rows)
    if not r_opts:
        return None
    b_opts = _divisors(batch)
    total = batch * rows * row_bytes
    floor_eff = min(floor, max(row_bytes, total // min_steps))
    best_key, best = None, None
    for bb in b_opts:
        for rb in r_opts:
            blk = bb * rb * row_bytes
            steps = (batch // bb) * (rows // rb)
            fits = blk <= budget
            big = blk >= floor_eff
            key = (fits, big and steps >= min_steps, big and steps >= 2,
                   blk if fits else -blk)
            if best_key is None or key > best_key:
                best_key, best = key, (bb, rb)
    return best


def _run_silu(x_view, block_shape, index_map, grid):
    """Elementwise SiLU over the blocks the specs cover; everything the specs
    do NOT cover is carried through bit-identically by input/output aliasing."""
    spec = pl.BlockSpec(block_shape, index_map)
    return pl.pallas_call(
        _silu_kernel,
        out_shape=jax.ShapeDtypeStruct(x_view.shape, x_view.dtype),
        grid_spec=pltpu.PrefetchScalarGridSpec(
            num_scalar_prefetch=0, grid=grid,
            in_specs=[spec], out_specs=spec),
        input_output_aliases={0: 0},
        compiler_params=_COMPILER_PARAMS,
    )(x_view)


def _even_path(x, B, c, HW):
    # View channels as (2, c): half 0 gets SiLU, half 1 is identity (aliased).
    N = c * HW
    L = _pick_lane_width(N)
    R, L = (N // L, L) if L else (c, HW)          # lane-dense when possible
    x4 = x.reshape(B, 2, R, L)
    bb, rb = _choose_tiles(B, R, L * x.dtype.itemsize, rows_full=True)
    out4 = _run_silu(x4, (bb, 1, rb, L), lambda b, r: (b, 0, r, 0),
                     grid=(B // bb, R // rb))
    return out4.reshape(x.shape)


def _odd_aliased_path(x, B, C, c, HW):
    # Odd C with c % 8 == 0: channel-tiled blocks over a (B, C, HW) view cover
    # exactly channels [0, c); aliasing keeps channels [c, C) untouched.
    tiles = _choose_tiles(B, c, HW * x.dtype.itemsize, rows_full=False)
    if tiles is None:
        return None
    bb, cb = tiles
    x3 = x.reshape(B, C, HW)
    out3 = _run_silu(x3, (bb, cb, HW), lambda b, ci: (b, ci, 0),
                     grid=(B // bb, c // cb))
    return out3.reshape(x.shape)


def _odd_concat_path(x, B, c, H, W):
    # Last resort (odd C, c % 8 != 0 -> no legal aliased block): SiLU on a
    # contiguous copy of the first c channels, then concat with the tail.
    HW = H * W
    N = c * HW
    L = _pick_lane_width(N)
    R, L = (N // L, L) if L else (c, HW)
    first = x[:, :c].reshape(B, R, L)
    bb, rb = _choose_tiles(B, R, L * x.dtype.itemsize, rows_full=True)
    act = _run_silu(first, (bb, rb, L), lambda b, r: (b, r, 0),
                    grid=(B // bb, R // rb))
    return jnp.concatenate([act.reshape(B, c, H, W), x[:, c:]], axis=1)


def half_channel_op(x):
    """HalfChannelOp(op=SiLU): cat([silu(x[:, :C//2]), x[:, C//2:]], dim=1).

    x: (B, C, H, W).  Pure function.  To realize the bandwidth saving of the
    aliased identity half, call it with x donated (see half_channel_op_fast);
    without donation XLA inserts a defensive copy (correct, just slower).
    """
    B, C, H, W = x.shape
    c = C // 2
    if c == 0:
        return x
    HW = H * W
    if C % 2 == 0:
        return _even_path(x, B, c, HW)
    out = _odd_aliased_path(x, B, C, c, HW)
    if out is not None:
        return out
    return _odd_concat_path(x, B, c, H, W)


# Jitted entry points.  Donation turns the input/output aliasing into a real
# HBM-traffic saving (the caller must not reuse x afterwards).
_impl_donated = jax.jit(half_channel_op, donate_argnums=0)
_impl_copying = jax.jit(half_channel_op)


def _uses_aliased_path(shape):
    C = shape[1]
    c = C // 2
    return c > 0 and (C % 2 == 0 or c % 8 == 0)


def half_channel_op_fast(x):
    """Dispatch on static shape: donate x when the in-place aliased path
    applies; otherwise use the non-donating jit (the concat fallback would
    leave the donated buffer unused)."""
    if _uses_aliased_path(x.shape):
        return _impl_donated(x)
    return _impl_copying(x)


def _reference(x):
    # Pure-JAX reference of the PyTorch forward (op = SiLU).
    c = x.shape[1] // 2
    first = x[:, :c]
    first = first * (1.0 / (1.0 + jnp.exp(-first)))
    return jnp.concatenate([first, x[:, c:]], axis=1)


if __name__ == "__main__":
    # Donation is best-effort: if XLA ever declines to reuse a donated buffer
    # it falls back to a copy (still correct).  Keep the advisory warning from
    # polluting an otherwise clean run.
    warnings.filterwarnings("ignore", message="Some donated buffers were not usable")

    # Even-C primary path: aliased, lane-dense, multi-step parallel grid.
    x = jax.random.normal(jax.random.PRNGKey(0), (2, 4, 16, 16), dtype=jnp.float32)
    ref = _reference(x)                       # computed before x is donated
    out = jax.block_until_ready(half_channel_op_fast(x))
    assert out.shape == ref.shape and out.dtype == ref.dtype
    assert jnp.allclose(out, ref, atol=1e-5, rtol=1e-5)

    # Odd-C aliased path (c = 8, multiple of 8 -> no slice, no concat).
    x_odd8 = jax.random.normal(jax.random.PRNGKey(1), (2, 17, 8, 16), dtype=jnp.float32)
    ref_odd8 = _reference(x_odd8)
    out_odd8 = jax.block_until_ready(half_channel_op_fast(x_odd8))
    assert jnp.allclose(out_odd8, ref_odd8, atol=1e-5, rtol=1e-5)

    # Odd-C concat fallback (c = 2, not a multiple of 8); not donated.
    x_odd = jax.random.normal(jax.random.PRNGKey(2), (2, 5, 8, 16), dtype=jnp.float32)
    ref_odd = _reference(x_odd)
    out_odd = jax.block_until_ready(half_channel_op_fast(x_odd))
    assert jnp.allclose(out_odd, ref_odd, atol=1e-5, rtol=1e-5)

    print("KERNEL_OK")
</pallas_src>

<mosaic_0001>
module attributes {stable_mosaic.version = 11 : i64} {
  func.func @_silu_kernel(%arg0: i32, %arg1: i32, %arg2: memref<1x1x1x512xf32, #tpu.memory_space<vmem>>, %arg3: memref<1x1x1x512xf32, #tpu.memory_space<vmem>>) attributes {dimension_semantics = [#tpu.dimension_semantics<parallel>, #tpu.dimension_semantics<parallel>], iteration_bounds = array<i64: 2, 1>, scalar_prefetch = 0 : i64, scratch_operands = 0 : i64, tpu.core_type = #tpu.core_type<tc>, window_params = [{transform_indices = @transform_0, window_bounds = array<i64: 1, 1, 1, 512>}, {transform_indices = @transform_1, window_bounds = array<i64: 1, 1, 1, 512>}]} {
    %c0 = arith.constant 0 : index
    %c0_0 = arith.constant 0 : index
    %c0_1 = arith.constant 0 : index
    %c0_2 = arith.constant 0 : index
    %0 = vector.load %arg2[%c0, %c0_0, %c0_1, %c0_2] : memref<1x1x1x512xf32, #tpu.memory_space<vmem>>, vector<1x1x1x512xf32>
    %cst = arith.constant 5.000000e-01 : f32
    %1 = vector.broadcast %cst : f32 to vector<1x1x1x512xf32>
    %2 = arith.mulf %1, %0 : vector<1x1x1x512xf32>
    %3 = math.tanh %2 : vector<1x1x1x512xf32>
    %cst_3 = arith.constant 5.000000e-01 : f32
    %4 = vector.broadcast %cst_3 : f32 to vector<1x1x1x512xf32>
    %5 = arith.mulf %4, %3 : vector<1x1x1x512xf32>
    %cst_4 = arith.constant 5.000000e-01 : f32
    %6 = vector.broadcast %cst_4 : f32 to vector<1x1x1x512xf32>
    %7 = arith.addf %5, %6 : vector<1x1x1x512xf32>
    %8 = arith.mulf %0, %7 : vector<1x1x1x512xf32>
    %c0_5 = arith.constant 0 : index
    %c0_6 = arith.constant 0 : index
    %c0_7 = arith.constant 0 : index
    %c0_8 = arith.constant 0 : index
    %9 = vector.load %arg3[%c0_5, %c0_6, %c0_7, %c0_8] : memref<1x1x1x512xf32, #tpu.memory_space<vmem>>, vector<1x1x1x512xf32>
    tpu.vector_store %arg3[%c0_5, %c0_6, %c0_7, %c0_8], %8 {strides = array<i32>} : memref<1x1x1x512xf32, #tpu.memory_space<vmem>>, vector<1x1x1x512xf32>,
    return
  }
  func.func @transform_0(%arg0: i32, %arg1: i32) -> (i32, i32, i32, i32) {
    %c0_i32 = arith.constant 0 : i32
    %c0_i32_0 = arith.constant 0 : i32
    %c0_i32_1 = arith.constant 0 : i32
    return %arg0, %c0_i32, %arg1, %c0_i32_0 : i32, i32, i32, i32
  }
  func.func @transform_1(%arg0: i32, %arg1: i32) -> (i32, i32, i32, i32) {
    %c0_i32 = arith.constant 0 : i32
    %c0_i32_0 = arith.constant 0 : i32
    %c0_i32_1 = arith.constant 0 : i32
    return %arg0, %c0_i32, %arg1, %c0_i32_0 : i32, i32, i32, i32
  }
}

</mosaic_0001>

<llo_original>
// kernel: half_channel_op.1
$region0: #{half_channel_op.1}
  #allocation0 [shape = 'u32[]', space=smem, size = 0x4, offset = 0x4, fixed_abs, tag = 'smem constant byte address 0x4 - core index']
  #allocation1 [shape = 'u32[72,128]{1,0:T(1,128)}', space=vmem, size = 0x9000, scoped, tag = 'internal scratch']
  %s0 = inlined_call_operand.vmem [shape: f32[2,2,1,512], index: 0, kind: input, shape index: {}, may-alias: {0,1}]
  %s1 = inlined_call_operand.vmem [shape: f32[2,2,1,512], index: 1, kind: output, shape index: {}, may-alias: {0,1}]
  %s2 = sld [smem:[#allocation0]]
  $region37: #{half_channel_op.1} parent=0
    _
  %s4 = ssub.s32 1, %s2
  %s5 = scalar_select 0, %s4, %s2
  loop: start=0, step=1, limit=4
  $region2: #{half_channel_op.1} parent=0 // loop_pre_header
    _
  $region3: #{half_channel_op.1} parent=0 // loop_header
    %s7 = sphi 0, %s11
    %p8 = scmp.ge.s32.totalorder %s7, 4
    %s14 = sphi 0, %s26
    %s15 = sphi 0, %s22
    %s16 = sphi 0, %s14
    %s17 = sphi 0, %s15
    %s18 = sphi 0, %s16
    %s19 = sphi 0, %s17
    %s31 = sphi 0, %s33
    %s34 = sphi 0, %s31
    %s35 = sphi 0, %s34
    %s51 = sphi 0, %s35
    %s59 = sphi 0, %s61
    %s62 = sphi 0, %s59
    %s63 = sphi 0, %s62
    %s79 = sphi 0, %s63
  $region4: #{half_channel_op.1} parent=0 // loop_header_branch
    %10 = sbr.rel (%p8) target = $region8
  $region5: #{half_channel_op.1} parent=0 // loop_body
    %s12 = ssub.s32 %s7, 1
    %s13 = ssub.s32 %s7, 2
    %s20 = sadd.s32 1, %s15
    %p21 = scmp.ge.s32.totalorder %s20, 1
    %s22 = scalar_select %p21, 0, %s20
    %s23 = sadd.s32 1, %s14
    %s24 = scalar_select %p21, %s23, %s14
    %p25 = scmp.ge.s32.totalorder %s24, 2
    %s26 = scalar_select %p25, 0, %s24
    %s27 = ssub.s32 %s14, %s26
    %s28 = ssub.s32 %s15, %s22
    %s29 = sor.u32 %s27, %s28
    %p30 = scmp.eq.s32.totalorder %s29, 0
    %s32 = sadd.s32 %s31, 1
    %s33 = scalar_select %p30, %s31, %s32
    %p36 = pneg %p30
    %p37 = scmp.eq.s32.totalorder %s7, 1
    %p38 = por %p36, %p37
    %p39 = scmp.ne.s32.totalorder %s31, %s34
    %p40 = scmp.eq.s32.totalorder %s7, 0
    %p41 = por %p39, %p40
    %p42 = scmp.ne.s32.totalorder %s31, %s34
    %p43 = scmp.eq.s32.totalorder %s12, 1
    %p44 = por %p42, %p43
    %p45 = scmp.ne.s32.totalorder %s34, %s35
    %p46 = scmp.eq.s32.totalorder %s12, 0
    %p47 = por %p45, %p46
    %p48 = scmp.ne.s32.totalorder %s34, %s35
    %p49 = scmp.eq.s32.totalorder %s13, 1
    %p50 = por %p48, %p49
    %p52 = scmp.ne.s32.totalorder %s35, %s51
    %p53 = scmp.eq.s32.totalorder %s13, 0
    %p54 = por %p52, %p53
    %s55 = ssub.s32 %s14, %s26
    %s56 = ssub.s32 %s15, %s22
    %s57 = sor.u32 %s55, %s56
    %p58 = scmp.eq.s32.totalorder %s57, 0
    %s60 = sadd.s32 %s59, 1
    %s61 = scalar_select %p58, %s59, %s60
    %p64 = pneg %p58
    %p65 = scmp.eq.s32.totalorder %s7, 1
    %p66 = por %p64, %p65
    %p67 = scmp.ne.s32.totalorder %s59, %s62
    %p68 = scmp.eq.s32.totalorder %s7, 0
    %p69 = por %p67, %p68
    %p70 = scmp.ne.s32.totalorder %s59, %s62
    %p71 = scmp.eq.s32.totalorder %s12, 1
    %p72 = por %p70, %p71
    %p73 = scmp.ne.s32.totalorder %s62, %s63
    %p74 = scmp.eq.s32.totalorder %s12, 0
    %p75 = por %p73, %p74
    %p76 = scmp.ne.s32.totalorder %s62, %s63
    %p77 = scmp.eq.s32.totalorder %s13, 1
    %p78 = por %p76, %p77
    %p80 = scmp.ne.s32.totalorder %s63, %s79
    %p81 = scmp.eq.s32.totalorder %s13, 0
    %p82 = por %p80, %p81
    %p83 = scmp.le.s32.totalorder 1, %s7
    %p84 = scmp.lt.s32.totalorder %s7, 3
    %p85 = pnand %p83, %p84
    %p86 = pneg %p85
    // Predicated region
    $region9: #{half_channel_op.1} parent=5 // pred_check
      _
    $region10: #{half_channel_op.1} parent=5 // pred_check_branch
      %88 = sbr.rel (%p85) target = $region12
    $region11: #{half_channel_op.1} parent=5 // pred_region
      %s89 = ssub.s32 %s7, 1
    $region12: #{half_channel_op.1} parent=5 // pred_fallthru
      _
    %p90 = scmp.lt.s32.totalorder %s7, 2
    // Predicated region
    $region13: #{half_channel_op.1} parent=5 // pred_check
      %p91 = pneg %p90
    $region14: #{half_channel_op.1} parent=5 // pred_check_branch
      %93 = sbr.rel (%p91) target = $region16
    $region15: #{half_channel_op.1} parent=5 // pred_region
      // Predicated region
      $region17: #{half_channel_op.1} parent=15 // pred_check
        %p94 = pneg %p41
      $region18: #{half_channel_op.1} parent=15 // pred_check_branch
        %96 = sbr.rel (%p94) target = $region20
      $region19: #{half_channel_op.1} parent=15 // pred_region
        %p97 = scmp.lt.s32.totalorder %s14, 1
        %s98 = scalar_select %p97, %s14, 1
        %p99 = scmp.lt.s32.totalorder %s15, 0
        %s100 = scalar_select %p99, %s15, 0
        %s101 = smul.addr %s100, 4
        %s102 = smul.addr %s98, 8
        %s103 = sadd.s32 %s101, %s102
        %s104 = scalar_lea.vmem %s0, %s103
      $region20: #{half_channel_op.1} parent=15 // pred_fallthru
        _
    $region16: #{half_channel_op.1} parent=5 // pred_fallthru
      _
    %p105 = scmp.le.s32.totalorder 1, %s7
    %p106 = scmp.lt.s32.totalorder %s7, 3
    %p107 = pnand %p105, %p106
    %p108 = pneg %p107
    // Predicated region
    $region21: #{half_channel_op.1} parent=5 // pred_check
      _
    $region22: #{half_channel_op.1} parent=5 // pred_check_branch
      %110 = sbr.rel (%p107) target = $region24
    $region23: #{half_channel_op.1} parent=5 // pred_region
      %s111 = ssub.s32 %s7, 1
      %p112 = scmp.lt.s32.totalorder %s16, 1
      %s113 = scalar_select %p112, %s16, 1
      %p114 = scmp.lt.s32.totalorder %s17, 0
      %s115 = scalar_select %p114, %s17, 0
      %s116 = smul.addr %s115, 4
      %s117 = smul.addr %s113, 8
      %s118 = sadd.s32 %s116, %s117
      %s119 = scalar_lea.vmem %s0, %s118
      %p120 = pneg %p47
      %p121 = pneg %p44
      %p122 = pneg %p75
      %p123 = pneg %p72
      %p124 = scmp.lt.s32.totalorder %s16, 1
      %s125 = scalar_select %p124, %s16, 1
      %p126 = scmp.lt.s32.totalorder %s17, 0
      %s127 = scalar_select %p126, %s17, 0
      %s128 = smul.addr %s127, 4
      %s129 = smul.addr %s125, 8
      %s130 = sadd.s32 %s128, %s129
      %s131 = scalar_lea.vmem %s1, %s130
      %p132 = scmp.lt.s32.totalorder %s16, 1
      %s133 = scalar_select %p132, %s16, 1
      %p134 = scmp.lt.s32.totalorder %s17, 0
      %s135 = scalar_select %p134, %s17, 0
      %s136 = smul.addr %s135, 4
      %s137 = smul.addr %s133, 8
      %s138 = sadd.s32 %s136, %s137
      %s139 = scalar_lea.vmem %s0, %s138
      %p140 = scmp.lt.s32.totalorder %s16, 1
      %s141 = scalar_select %p140, %s16, 1
      %p142 = scmp.lt.s32.totalorder %s17, 0
      %s143 = scalar_select %p142, %s17, 0
      %s144 = smul.addr %s143, 4
      %s145 = smul.addr %s141, 8
      %s146 = sadd.s32 %s144, %s145
      %s147 = scalar_lea.vmem %s1, %s146
      %v148 = vld [vmem:[%s139] sm:$0xf]
      %v149 = vmul.f32 %v148, 0.5
      %v150 = vtanh.pop %v149
      %v151 = vmul.f32 %v150, 0.5
      %v152 = vadd.f32 %v151, 0.5
      %v153 = vmul.f32 %v148, %v152
      %v154 = vlaneseq
      %vm155 = vcmp.ge.s32.totalorder %v154, 0
      %vm156 = vcmp.lt.s32.totalorder %v154, 512
      %vm157 = vmand %vm155, %vm156
      %158 = vst.msk [vmem:[%s147] sm:$0xf] %vm157, %v153
      %p159 = scmp.lt.s32.totalorder %s16, 1
      %s160 = scalar_select %p159, %s16, 1
      %p161 = scmp.lt.s32.totalorder %s17, 0
      %s162 = scalar_select %p161, %s17, 0
      %s163 = smul.addr %s162, 4
      %s164 = smul.addr %s160, 8
      %s165 = sadd.s32 %s163, %s164
      %s166 = scalar_lea.vmem %s1, %s165
      // Predicated region
      $region25: #{half_channel_op.1} parent=23 // pred_check
        %p167 = pneg %p72
      $region26: #{half_channel_op.1} parent=23 // pred_check_branch
        %169 = sbr.rel (%p167) target = $region28
      $region27: #{half_channel_op.1} parent=23 // pred_region
        _
      $region28: #{half_channel_op.1} parent=23 // pred_fallthru
        _
    $region24: #{half_channel_op.1} parent=5 // pred_fallthru
      _
    %p170 = scmp.le.s32.totalorder 2, %s7
    // Predicated region
    $region29: #{half_channel_op.1} parent=5 // pred_check
      %p171 = pneg %p170
    $region30: #{half_channel_op.1} parent=5 // pred_check_branch
      %173 = sbr.rel (%p171) target = $region32
    $region31: #{half_channel_op.1} parent=5 // pred_region
      %s174 = ssub.s32 %s7, 2
      // Predicated region
      $region33: #{half_channel_op.1} parent=31 // pred_check
        %p175 = pneg %p78
      $region34: #{half_channel_op.1} parent=31 // pred_check_branch
        %177 = sbr.rel (%p175) target = $region36
      $region35: #{half_channel_op.1} parent=31 // pred_region
        %p178 = scmp.lt.s32.totalorder %s18, 1
        %s179 = scalar_select %p178, %s18, 1
        %p180 = scmp.lt.s32.totalorder %s19, 0
        %s181 = scalar_select %p180, %s19, 0
        %s182 = smul.addr %s181, 4
        %s183 = smul.addr %s179, 8
        %s184 = sadd.s32 %s182, %s183
        %s185 = scalar_lea.vmem %s1, %s184
      $region36: #{half_channel_op.1} parent=31 // pred_fallthru
        _
    $region32: #{half_channel_op.1} parent=5 // pred_fallthru
      _
  $region6: #{half_channel_op.1} parent=0 // loop_footer
    %s11 = sadd.s32 1, %s7
  $region7: #{half_channel_op.1} parent=0 // loop_footer_branch
    %6 = sbr.rel target = $region3
  $region8: #{half_channel_op.1} parent=0 // loop_exit
    _

</llo_original>
